<compile_context>
chip_gen: v5e
topology: v5e:2x2
jax: 0.10.0
libtpu: 0.0.40
codegen_flags: <defaults>
</compile_context>

<pallas_src>
import numpy as np
import jax
import jax.numpy as jnp
from jax.experimental import pallas as pl
from jax.experimental.pallas import tpu as pltpu


# ----------------------------------------------------------------------------
# Kernels
# ----------------------------------------------------------------------------
def _multiply_proj_kernel(ct_ref, cor_ref, sag_ref, w_ref, b_ref, o_ref):
    """out = ct * (((cor + sag)/2) @ W + b) broadcast over K.

    ct: (tb, K, D_ct); cor/sag: (tb, D_pet); w: (D_pet, D_ct); b: (1, D_ct).
    W/b use constant block indices -> fetched once, resident in VMEM.
    pet stays f32 until the multiply (matches the PyTorch Linear numerics).
    """
    avg = (cor_ref[...].astype(jnp.float32) + sag_ref[...].astype(jnp.float32)) * 0.5
    pet = jnp.dot(avg, w_ref[...], preferred_element_type=jnp.float32) + b_ref[...]
    o_ref[...] = (ct_ref[...] * pet[:, None, :]).astype(o_ref.dtype)


def _multiply_avg_kernel(ct_ref, cor_ref, sag_ref, o_ref):
    """Identity-projection path: out = ct * ((cor + sag)/2) broadcast over K.

    ct: (tb, K, D); cor/sag: (tb, D); o: (tb, K, D).
    """
    pet = (cor_ref[...] + sag_ref[...]) * 0.5                       # (tb, D)
    o_ref[...] = (ct_ref[...] * pet[:, None, :]).astype(o_ref.dtype)


def _concat_kernel(ct_ref, cor_ref, sag_ref, o_ref):
    """out[:, :K] = ct ; out[:, K] = cor ; out[:, K+1] = sag.

    ct: (tb, K, D); cor/sag: (tb, 1, D); o: (tb, K+2, D).
    """
    k = ct_ref.shape[1]
    o_ref[:, :k, :] = ct_ref[...].astype(o_ref.dtype)
    o_ref[:, k:k + 1, :] = cor_ref[...].astype(o_ref.dtype)
    o_ref[:, k + 1:k + 2, :] = sag_ref[...].astype(o_ref.dtype)


# ----------------------------------------------------------------------------
# Tiling helpers
# ----------------------------------------------------------------------------
def _round_up(x: int, m: int) -> int:
    return ((x + m - 1) // m) * m


def _multi_tensorcore_chip() -> bool:
    """True on chips whose Pallas grid is sharded across >1 TensorCore
    (v4 / v5p megacore, v7x).  v5e / v6e are single-TC: forcing >=2 grid steps
    there only halves the block size for zero parallelism benefit."""
    try:
        kind = jax.devices()[0].device_kind.lower()
    except Exception:
        return False
    if "lite" in kind or "v5e" in kind or "v6e" in kind:
        return False
    return any(tag in kind for tag in ("v4", "v5p", "v7"))


def _choose_batch_tile(B: int, per_batch_bytes: int, target_bytes: int,
                       multi_core: bool) -> int:
    """Batches per grid step.

    Sized so streamed bytes per step (inputs + output) hit ~target_bytes
    (>=1 MiB blocks already reach ~85% of HBM roofline; bigger amortises the
    ~0.35 us/step pipeline overhead further).  On multi-TC chips keep >= 2
    grid steps so both cores get work.  When tb < B the tile is kept a
    multiple of 8 so the 2-D (tb, D) PET blocks satisfy the (8, 128) sublane
    constraint; typical B (a multiple of 8) then also divides evenly, keeping
    the last block un-ragged.
    """
    tb = max(1, min(B, target_bytes // max(per_batch_bytes, 1)))
    if multi_core and B >= 2:
        tb = min(tb, -(-B // 2))          # ceil(B/2): at least 2 grid steps
    if tb < B:
        aligned = (tb // 8) * 8
        tb = aligned if aligned >= 8 else min(8, B)
        tb = min(tb, B)
    return tb


def _padded_block_bytes(shape, dtype) -> int:
    """VMEM footprint of one pipeline buffer, including the sublane/lane
    padding Mosaic applies to the last two dims (so (tb,1,D) blocks are
    counted at their real ~8x-padded size)."""
    itemsize = jnp.dtype(dtype).itemsize
    sublane = {1: 32, 2: 16}.get(itemsize, 8)
    dims = list(shape)
    dims[-1] = _round_up(dims[-1], 128)
    if len(dims) >= 2:
        dims[-2] = _round_up(dims[-2], sublane)
    n = 1
    for d in dims:
        n *= d
    return n * itemsize


def _vmem_limit(blocks, headroom: int = 8 << 20) -> int:
    """Double-buffered pipeline footprint + headroom (explicit so tiles sized
    for v5e/v6e's 128 MiB VMEM never silently overshoot v7x's 64 MiB)."""
    return int(2 * sum(_padded_block_bytes(s, d) for s, d in blocks) + headroom)


# ----------------------------------------------------------------------------
# Module wrapper
# ----------------------------------------------------------------------------
class MultiModalPETFusionPallas:
    def __init__(self, fusion_mode: str = "multiply", ct_feature_dim: int = 512,
                 pet_feature_dim: int = 512, attention_k: int = 32,
                 key=None, dtype=jnp.float32, target_block_bytes: int = 16 << 20):
        self.fusion_mode = fusion_mode
        self.ct_feature_dim = ct_feature_dim
        self.pet_feature_dim = pet_feature_dim
        self.attention_k = attention_k
        self.dtype = dtype
        self.target_block_bytes = target_block_bytes
        # nn.Linear only exists for multiply-mode with mismatched dims; else Identity.
        self.has_projection = (fusion_mode == "multiply"
                               and pet_feature_dim != ct_feature_dim)
        if self.has_projection:
            if key is None:
                key = jax.random.PRNGKey(0)
            kw, kb = jax.random.split(key)
            bound = 1.0 / np.sqrt(pet_feature_dim)
            # stored as (D_pet, D_ct) == torch nn.Linear .weight.T (deterministic init)
            self.w = jax.random.uniform(kw, (pet_feature_dim, ct_feature_dim),
                                        dtype, -bound, bound)
            self.b = jax.random.uniform(kb, (1, ct_feature_dim), dtype, -bound, bound)
        else:
            self.w, self.b = None, None
        self.output_k = attention_k + 2 if fusion_mode == "concatenate" else attention_k

    # ---- multiply mode ------------------------------------------------------
    def _multiply(self, ct_features, cor, sag):
        B, K, D_ct = ct_features.shape
        out_dtype = ct_features.dtype
        it_ct = jnp.dtype(ct_features.dtype).itemsize
        it_pet = jnp.dtype(cor.dtype).itemsize
        D_pet = cor.shape[-1]

        per_batch = 2 * K * D_ct * it_ct + 2 * D_pet * it_pet   # ct in/out + cor + sag
        tb = _choose_batch_tile(B, per_batch, self.target_block_bytes,
                                _multi_tensorcore_chip())
        grid = (pl.cdiv(B, tb),)

        if self.has_projection:
            w, b = self.w, self.b
            blocks = [((tb, K, D_ct), ct_features.dtype),
                      ((tb, D_pet), cor.dtype), ((tb, D_pet), sag.dtype),
                      (w.shape, w.dtype), (b.shape, b.dtype),
                      ((tb, K, D_ct), out_dtype)]
            grid_spec = pltpu.PrefetchScalarGridSpec(
                num_scalar_prefetch=0, grid=grid,
                in_specs=[
                    pl.BlockSpec((tb, K, D_ct), lambda i: (i, 0, 0)),
                    pl.BlockSpec((tb, D_pet), lambda i: (i, 0)),
                    pl.BlockSpec((tb, D_pet), lambda i: (i, 0)),
                    pl.BlockSpec(w.shape, lambda i: (0, 0)),   # resident (const idx)
                    pl.BlockSpec(b.shape, lambda i: (0, 0)),   # resident (const idx)
                ],
                out_specs=pl.BlockSpec((tb, K, D_ct), lambda i: (i, 0, 0)),
            )
            return pl.pallas_call(
                _multiply_proj_kernel, grid_spec=grid_spec,
                out_shape=jax.ShapeDtypeStruct((B, K, D_ct), out_dtype),
                compiler_params=pltpu.CompilerParams(
                    dimension_semantics=("parallel",),
                    vmem_limit_bytes=_vmem_limit(blocks)),
            )(ct_features, cor, sag, w, b)
        else:
            assert cor.shape[-1] == D_ct and sag.shape[-1] == D_ct, (
                "multiply mode with nn.Identity requires pet_feature_dim == "
                f"ct_feature_dim (got {cor.shape[-1]} vs {D_ct}).")
            blocks = [((tb, K, D_ct), ct_features.dtype),
                      ((tb, D_ct), cor.dtype), ((tb, D_ct), sag.dtype),
                      ((tb, K, D_ct), out_dtype)]
            grid_spec = pltpu.PrefetchScalarGridSpec(
                num_scalar_prefetch=0, grid=grid,
                in_specs=[
                    pl.BlockSpec((tb, K, D_ct), lambda i: (i, 0, 0)),
                    pl.BlockSpec((tb, D_ct), lambda i: (i, 0)),
                    pl.BlockSpec((tb, D_ct), lambda i: (i, 0)),
                ],
                out_specs=pl.BlockSpec((tb, K, D_ct), lambda i: (i, 0, 0)),
            )
            return pl.pallas_call(
                _multiply_avg_kernel, grid_spec=grid_spec,
                out_shape=jax.ShapeDtypeStruct((B, K, D_ct), out_dtype),
                compiler_params=pltpu.CompilerParams(
                    dimension_semantics=("parallel",),
                    vmem_limit_bytes=_vmem_limit(blocks)),
            )(ct_features, cor, sag)

    # ---- concatenate mode ---------------------------------------------------
    def _concatenate(self, ct_features, cor, sag):
        B, K, D_ct = ct_features.shape
        assert cor.shape[-1] == D_ct and sag.shape[-1] == D_ct, (
            "concatenate mode requires pet_feature_dim == ct_feature_dim "
            f"(got {cor.shape[-1]} vs {D_ct}); nn.Identity cannot reshape them.")
        it = jnp.dtype(ct_features.dtype).itemsize
        per_batch = (2 * K + 4) * D_ct * it    # ct in + out(K+2) + cor + sag
        tb = _choose_batch_tile(B, per_batch, self.target_block_bytes,
                                _multi_tensorcore_chip())
        grid = (pl.cdiv(B, tb),)

        # Free (metadata-only) reshapes — no (B,2,D) HBM stack materialised.
        cor3 = cor[:, None, :]
        sag3 = sag[:, None, :]

        blocks = [((tb, K, D_ct), ct_features.dtype),
                  ((tb, 1, D_ct), cor.dtype), ((tb, 1, D_ct), sag.dtype),
                  ((tb, K + 2, D_ct), ct_features.dtype)]
        grid_spec = pltpu.PrefetchScalarGridSpec(
            num_scalar_prefetch=0, grid=grid,
            in_specs=[
                pl.BlockSpec((tb, K, D_ct), lambda i: (i, 0, 0)),
                pl.BlockSpec((tb, 1, D_ct), lambda i: (i, 0, 0)),
                pl.BlockSpec((tb, 1, D_ct), lambda i: (i, 0, 0)),
            ],
            out_specs=pl.BlockSpec((tb, K + 2, D_ct), lambda i: (i, 0, 0)),
        )
        return pl.pallas_call(
            _concat_kernel, grid_spec=grid_spec,
            out_shape=jax.ShapeDtypeStruct((B, K + 2, D_ct), ct_features.dtype),
            compiler_params=pltpu.CompilerParams(
                dimension_semantics=("parallel",),
                vmem_limit_bytes=_vmem_limit(blocks)),
        )(ct_features, cor3, sag3)

    def __call__(self, ct_features, pet_coronal=None, pet_sagittal=None):
        batch_size = ct_features.shape[0]
        if self.fusion_mode == "multiply":
            if pet_coronal is not None and pet_sagittal is not None:
                return self._multiply(ct_features, pet_coronal, pet_sagittal)
            return ct_features
        elif self.fusion_mode == "concatenate":
            if pet_coronal is not None and pet_sagittal is not None:
                return self._concatenate(ct_features, pet_coronal, pet_sagittal)
            # missing-modality path: pure zero padding (data movement only, glue)
            zeros = jnp.zeros((batch_size, 2, self.ct_feature_dim), ct_features.dtype)
            return jnp.concatenate([ct_features, zeros], axis=1)
        else:
            raise ValueError(f"Unknown fusion mode: {self.fusion_mode}")


# ----------------------------------------------------------------------------
# Pure-JAX reference (mirrors the PyTorch forward)
# ----------------------------------------------------------------------------
def ref_multiply(ct, cor, sag, w=None, b=None):
    if w is not None:
        cor = cor @ w + b
        sag = sag @ w + b
    pet = (cor + sag) / 2.0
    return ct * pet[:, None, :]


def ref_concat(ct, cor, sag):
    return jnp.concatenate([ct, cor[:, None, :], sag[:, None, :]], axis=1)


# ----------------------------------------------------------------------------
if __name__ == "__main__":
    key = jax.random.PRNGKey(0)
    k0, k1, k2, k3, k4, k5, kparams = jax.random.split(key, 7)

    B, K = 8, 8
    D_ct, D_pet = 128, 256

    # --- case 1: multiply mode with projection (fused GEMM + broadcast mul) ---
    ct = jax.random.normal(k0, (B, K, D_ct), jnp.float32)
    cor = jax.random.normal(k1, (B, D_pet), jnp.float32)
    sag = jax.random.normal(k2, (B, D_pet), jnp.float32)
    mod = MultiModalPETFusionPallas("multiply", ct_feature_dim=D_ct,
                                    pet_feature_dim=D_pet, attention_k=K, key=kparams)
    out = jax.block_until_ready(mod(ct, cor, sag))
    np.testing.assert_allclose(np.asarray(out),
                               np.asarray(ref_multiply(ct, cor, sag, mod.w, mod.b)),
                               rtol=1e-5, atol=1e-5)

    # --- case 2: multiply mode, Identity projection (equal dims) ---
    D = 128
    ct2 = jax.random.normal(k3, (B, K, D), jnp.float32)
    cor2 = jax.random.normal(k4, (B, D), jnp.float32)
    sag2 = jax.random.normal(k5, (B, D), jnp.float32)
    mod2 = MultiModalPETFusionPallas("multiply", ct_feature_dim=D,
                                     pet_feature_dim=D, attention_k=K)
    out2 = jax.block_until_ready(mod2(ct2, cor2, sag2))
    np.testing.assert_allclose(np.asarray(out2),
                               np.asarray(ref_multiply(ct2, cor2, sag2)),
                               rtol=1e-6, atol=1e-6)

    # --- case 3: concatenate mode (output_k = K + 2) ---
    mod3 = MultiModalPETFusionPallas("concatenate", ct_feature_dim=D,
                                     pet_feature_dim=D, attention_k=K)
    out3 = jax.block_until_ready(mod3(ct2, cor2, sag2))
    np.testing.assert_allclose(np.asarray(out3),
                               np.asarray(ref_concat(ct2, cor2, sag2)), rtol=0, atol=0)

    # --- case 4: multiply mode with missing PET (passthrough) ---
    out4 = jax.block_until_ready(mod2(ct2))
    np.testing.assert_allclose(np.asarray(out4), np.asarray(ct2), rtol=0, atol=0)

    # --- case 5: concatenate mode with missing PET (zero padding, glue path) ---
    out5 = jax.block_until_ready(mod3(ct2))
    expect5 = jnp.concatenate([ct2, jnp.zeros((B, 2, D), ct2.dtype)], axis=1)
    np.testing.assert_allclose(np.asarray(out5), np.asarray(expect5), rtol=0, atol=0)

    # --- case 6: ragged batch tiling (B % tb != 0) on the fused-projection path ---
    B6 = 12
    ct6 = jax.random.normal(k0, (B6, K, D_ct), jnp.float32)
    cor6 = jax.random.normal(k1, (B6, D_pet), jnp.float32)
    sag6 = jax.random.normal(k2, (B6, D_pet), jnp.float32)
    mod6 = MultiModalPETFusionPallas("multiply", ct_feature_dim=D_ct,
                                     pet_feature_dim=D_pet, attention_k=K,
                                     key=kparams, target_block_bytes=80 * 1024)
    out6 = jax.block_until_ready(mod6(ct6, cor6, sag6))   # tb=8, grid=2, ragged tail
    np.testing.assert_allclose(np.asarray(out6),
                               np.asarray(ref_multiply(ct6, cor6, sag6, mod6.w, mod6.b)),
                               rtol=1e-5, atol=1e-5)

    print("KERNEL_OK")
</pallas_src>

<mosaic_0001>
module attributes {stable_mosaic.version = 11 : i64} {
  func.func @_multiply_proj_kernel(%arg0: i32, %arg1: memref<8x8x128xf32, #tpu.memory_space<vmem>>, %arg2: memref<8x256xf32, #tpu.memory_space<vmem>>, %arg3: memref<8x256xf32, #tpu.memory_space<vmem>>, %arg4: memref<256x128xf32, #tpu.memory_space<vmem>>, %arg5: memref<1x128xf32, #tpu.memory_space<vmem>>, %arg6: memref<8x8x128xf32, #tpu.memory_space<vmem>>) attributes {dimension_semantics = [#tpu.dimension_semantics<parallel>], iteration_bounds = array<i64: 1>, scalar_prefetch = 0 : i64, scratch_operands = 0 : i64, tpu.core_type = #tpu.core_type<tc>, window_params = [{transform_indices = @transform_0, window_bounds = array<i64: 8, 8, 128>}, {transform_indices = @transform_1, window_bounds = array<i64: 8, 256>}, {transform_indices = @transform_2, window_bounds = array<i64: 8, 256>}, {pipeline_mode = #tpu.pipeline_mode<synchronous>, transform_indices = @transform_3, window_bounds = array<i64: 256, 128>}, {pipeline_mode = #tpu.pipeline_mode<synchronous>, transform_indices = @transform_4, window_bounds = array<i64: 1, 128>}, {transform_indices = @transform_5, window_bounds = array<i64: 8, 8, 128>}]} {
    %c0 = arith.constant 0 : index
    %c0_0 = arith.constant 0 : index
    %0 = vector.load %arg2[%c0, %c0_0] : memref<8x256xf32, #tpu.memory_space<vmem>>, vector<8x256xf32>
    %c0_1 = arith.constant 0 : index
    %c0_2 = arith.constant 0 : index
    %1 = vector.load %arg3[%c0_1, %c0_2] : memref<8x256xf32, #tpu.memory_space<vmem>>, vector<8x256xf32>
    %2 = arith.addf %0, %1 : vector<8x256xf32>
    %cst = arith.constant 5.000000e-01 : f32
    %3 = vector.broadcast %cst : f32 to vector<8x256xf32>
    %4 = arith.mulf %2, %3 : vector<8x256xf32>
    %c0_3 = arith.constant 0 : index
    %c0_4 = arith.constant 0 : index
    %5 = vector.load %arg4[%c0_3, %c0_4] : memref<256x128xf32, #tpu.memory_space<vmem>>, vector<256x128xf32>
    %cst_5 = arith.constant dense<0.000000e+00> : vector<8x128xf32>
    %6 = tpu.matmul %4, %5, %cst_5 {dimension_numbers = #tpu.dot_dimension_numbers<[1], [0], [0], [1], [0, 0, 1, 1], [], []>} : vector<8x256xf32>, vector<256x128xf32>, vector<8x128xf32> -> vector<8x128xf32>
    %c0_6 = arith.constant 0 : index
    %c0_7 = arith.constant 0 : index
    %7 = vector.load %arg5[%c0_6, %c0_7] : memref<1x128xf32, #tpu.memory_space<vmem>>, vector<1x128xf32>
    %8 = vector.broadcast %7 : vector<1x128xf32> to vector<8x128xf32>
    %9 = arith.addf %6, %8 : vector<8x128xf32>
    %c0_8 = arith.constant 0 : index
    %c0_9 = arith.constant 0 : index
    %c0_10 = arith.constant 0 : index
    %10 = vector.load %arg1[%c0_8, %c0_9, %c0_10] : memref<8x8x128xf32, #tpu.memory_space<vmem>>, vector<8x8x128xf32>
    %11 = vector.shape_cast %9 : vector<8x128xf32> to vector<8x1x128xf32>
    %12 = vector.broadcast %11 : vector<8x1x128xf32> to vector<8x8x128xf32>
    %13 = arith.mulf %10, %12 : vector<8x8x128xf32>
    %c0_11 = arith.constant 0 : index
    %c0_12 = arith.constant 0 : index
    %c0_13 = arith.constant 0 : index
    %14 = vector.load %arg6[%c0_11, %c0_12, %c0_13] : memref<8x8x128xf32, #tpu.memory_space<vmem>>, vector<8x8x128xf32>
    tpu.vector_store %arg6[%c0_11, %c0_12, %c0_13], %13 {strides = array<i32>} : memref<8x8x128xf32, #tpu.memory_space<vmem>>, vector<8x8x128xf32>,
    return
  }
  func.func @transform_0(%arg0: i32) -> (i32, i32, i32) {
    %c0_i32 = arith.constant 0 : i32
    %c0_i32_0 = arith.constant 0 : i32
    %c0_i32_1 = arith.constant 0 : i32
    return %arg0, %c0_i32, %c0_i32_0 : i32, i32, i32
  }
  func.func @transform_1(%arg0: i32) -> (i32, i32) {
    %c0_i32 = arith.constant 0 : i32
    %c0_i32_0 = arith.constant 0 : i32
    return %arg0, %c0_i32 : i32, i32
  }
  func.func @transform_2(%arg0: i32) -> (i32, i32) {
    %c0_i32 = arith.constant 0 : i32
    %c0_i32_0 = arith.constant 0 : i32
    return %arg0, %c0_i32 : i32, i32
  }
  func.func @transform_3(%arg0: i32) -> (i32, i32) {
    %c0_i32 = arith.constant 0 : i32
    %c0_i32_0 = arith.constant 0 : i32
    %c0_i32_1 = arith.constant 0 : i32
    return %c0_i32, %c0_i32_0 : i32, i32
  }
  func.func @transform_4(%arg0: i32) -> (i32, i32) {
    %c0_i32 = arith.constant 0 : i32
    %c0_i32_0 = arith.constant 0 : i32
    %c0_i32_1 = arith.constant 0 : i32
    return %c0_i32, %c0_i32_0 : i32, i32
  }
  func.func @transform_5(%arg0: i32) -> (i32, i32, i32) {
    %c0_i32 = arith.constant 0 : i32
    %c0_i32_0 = arith.constant 0 : i32
    %c0_i32_1 = arith.constant 0 : i32
    return %arg0, %c0_i32, %c0_i32_0 : i32, i32, i32
  }
}

</mosaic_0001>

<llo_original>
// kernel: tpu_custom_call.1
$region0: #{tpu_custom_call.1}
  #allocation0 [shape = 'u32[]', space=smem, size = 0x4, offset = 0x4, fixed_abs, tag = 'smem constant byte address 0x4 - core index']
  #allocation1 [shape = 'u32[72,128]{1,0:T(1,128)}', space=vmem, size = 0x9000, scoped, tag = 'internal scratch']
  %s0 = inlined_call_operand.hbm [shape: f32[8,8,128], index: 0, kind: input, shape index: {}]
  %s1 = inlined_call_operand.hbm [shape: f32[8,256], index: 1, kind: input, shape index: {}]
  %s2 = inlined_call_operand.hbm [shape: f32[8,256], index: 2, kind: input, shape index: {}]
  %s3 = inlined_call_operand.hbm [shape: f32[256,128], index: 3, kind: input, shape index: {}]
  %s4 = inlined_call_operand.vmem [shape: f32[1,128], index: 4, kind: input, shape index: {}]
  %s5 = inlined_call_operand.hbm [shape: f32[8,8,128], index: 5, kind: output, shape index: {}]
  %s6 = sld [smem:[#allocation0]]
  $region46: #{tpu_custom_call.1} parent=0
    _
  %s8 = ssub.s32 1, %s6
  %s9 = scalar_select 0, %s8, %s6
  $region1: #{tpu_custom_call.1} parent=0
    #allocation2 [shape = 'u8[32768]{0}', space=vmem, size = 0x8000, scoped, tag = 'input window, operand 0, single buffered']
    #allocation3 [shape = 's32[1]{0}', space=sflag, size = 0x4, scoped, tag = 'scoped memory for tpu_custom_call.1']
    #allocation4 [shape = 's32[1]{0}', space=sflag, size = 0x4, scoped, tag = 'scoped memory for tpu_custom_call.1']
    #allocation5 [shape = 'u8[8192]{0}', space=vmem, size = 0x2000, scoped, tag = 'input window, operand 1, single buffered']
    #allocation6 [shape = 's32[1]{0}', space=sflag, size = 0x4, scoped, tag = 'scoped memory for tpu_custom_call.1']
    #allocation7 [shape = 'u8[8192]{0}', space=vmem, size = 0x2000, scoped, tag = 'input window, operand 2, single buffered']
    #allocation8 [shape = 'u8[131072]{0}', space=vmem, size = 0x20000, scoped, tag = 'input window, operand 3, single buffered']
    #allocation9 [shape = 's32[1]{0}', space=sflag, size = 0x4, scoped, tag = 'scoped memory for tpu_custom_call.1']
    #allocation10 [shape = 'u8[32768]{0}', space=vmem, size = 0x8000, scoped, tag = 'output window, operand 0, single buffered']
    %10 = vsyncpa [#allocation3], 0
    %11 = vsyncpa [#allocation6], 0
    %12 = vsyncpa [#allocation9], 0
    %13 = vsyncpa [#allocation4], 0
    // Predicated region
    $region2: #{tpu_custom_call.1} parent=1 // pred_check
      _
    $region3: #{tpu_custom_call.1} parent=1 // pred_check_branch
      %15 = sbr.rel (0) target = $region5
    $region4: #{tpu_custom_call.1} parent=1 // pred_region
      %17 = vsyncadd [#allocation3], 0
      %s18 = sshll.u32 %s0, 4
      %s19 = int_to_ptr.hbm [resolvable:$true] %s18
      %s20 = sshll.u32 [#allocation2], 4
      %s21 = int_to_ptr.vmem [resolvable:$true] %s20
      %26 = dma.hbm_to_vmem [thread:$0]  %s19, 1024, %s21, [#allocation3], 128, 128, 8
    $region5: #{tpu_custom_call.1} parent=1 // pred_fallthru
      _
    // Predicated region
    $region6: #{tpu_custom_call.1} parent=1 // pred_check
      _
    $region7: #{tpu_custom_call.1} parent=1 // pred_check_branch
      %28 = sbr.rel (0) target = $region9
    $region8: #{tpu_custom_call.1} parent=1 // pred_region
      %30 = vsyncadd [#allocation6], 0
      %s32 = sshll.u32 %s1, 4
      %s33 = int_to_ptr.hbm [resolvable:$true] %s32
      %s34 = sshll.u32 [#allocation5], 4
      %s35 = int_to_ptr.vmem [resolvable:$true] %s34
      %37 = dma.hbm_to_vmem [thread:$0]  %s33, 256, %s35, [#allocation6]
    $region9: #{tpu_custom_call.1} parent=1 // pred_fallthru
      _
    // Predicated region
    $region10: #{tpu_custom_call.1} parent=1 // pred_check
      _
    $region11: #{tpu_custom_call.1} parent=1 // pred_check_branch
      %39 = sbr.rel (0) target = $region13
    $region12: #{tpu_custom_call.1} parent=1 // pred_region
      %41 = vsyncadd [#allocation6], 0
      %s43 = sshll.u32 %s2, 4
      %s44 = int_to_ptr.hbm [resolvable:$true] %s43
      %s45 = sshll.u32 [#allocation7], 4
      %s46 = int_to_ptr.vmem [resolvable:$true] %s45
      %48 = dma.hbm_to_vmem [thread:$0]  %s44, 256, %s46, [#allocation6]
    $region13: #{tpu_custom_call.1} parent=1 // pred_fallthru
      _
    // Predicated region
    $region14: #{tpu_custom_call.1} parent=1 // pred_check
      _
    $region15: #{tpu_custom_call.1} parent=1 // pred_check_branch
      %50 = sbr.rel (0) target = $region17
    $region16: #{tpu_custom_call.1} parent=1 // pred_region
      %52 = vsyncadd [#allocation9], 0
      %s53 = sshll.u32 %s3, 4
      %s54 = int_to_ptr.hbm [resolvable:$true] %s53
      %s55 = sshll.u32 [#allocation8], 4
      %s56 = int_to_ptr.vmem [resolvable:$true] %s55
      %61 = dma.hbm_to_vmem [thread:$0]  %s54, 4096, %s56, [#allocation9], 128, 128, 8
    $region17: #{tpu_custom_call.1} parent=1 // pred_fallthru
      _
    // Predicated region
    $region18: #{tpu_custom_call.1} parent=1 // pred_check
      _
    $region19: #{tpu_custom_call.1} parent=1 // pred_check_branch
      %63 = sbr.rel (0) target = $region21
    $region20: #{tpu_custom_call.1} parent=1 // pred_region
      _
    $region21: #{tpu_custom_call.1} parent=1 // pred_fallthru
      _
    // Predicated region
    $region22: #{tpu_custom_call.1} parent=1 // pred_check
      _
    $region23: #{tpu_custom_call.1} parent=1 // pred_check_branch
      %65 = sbr.rel (0) target = $region25
    $region24: #{tpu_custom_call.1} parent=1 // pred_region
      %67 = dma.done [#allocation3], 1024
    $region25: #{tpu_custom_call.1} parent=1 // pred_fallthru
      _
    // Predicated region
    $region26: #{tpu_custom_call.1} parent=1 // pred_check
      _
    $region27: #{tpu_custom_call.1} parent=1 // pred_check_branch
      %69 = sbr.rel (0) target = $region29
    $region28: #{tpu_custom_call.1} parent=1 // pred_region
      %71 = dma.done [#allocation6], 256
    $region29: #{tpu_custom_call.1} parent=1 // pred_fallthru
      _
    // Predicated region
    $region30: #{tpu_custom_call.1} parent=1 // pred_check
      _
    $region31: #{tpu_custom_call.1} parent=1 // pred_check_branch
      %73 = sbr.rel (0) target = $region33
    $region32: #{tpu_custom_call.1} parent=1 // pred_region
      %75 = dma.done [#allocation6], 256
    $region33: #{tpu_custom_call.1} parent=1 // pred_fallthru
      _
    // Predicated region
    $region34: #{tpu_custom_call.1} parent=1 // pred_check
      _
    $region35: #{tpu_custom_call.1} parent=1 // pred_check_branch
      %77 = sbr.rel (0) target = $region37
    $region36: #{tpu_custom_call.1} parent=1 // pred_region
      %79 = dma.done [#allocation9], 4096
    $region37: #{tpu_custom_call.1} parent=1 // pred_fallthru
      _
    %v80 = vld [vmem:[#allocation5] sm:$0xff]
    %v81 = vld [vmem:[#allocation5 + $0x8] sm:$0xff]
    %v82 = vld [vmem:[#allocation7] sm:$0xff]
    %v83 = vld [vmem:[#allocation7 + $0x8] sm:$0xff]
    %v84 = vadd.f32 %v80, %v82
    %v85 = vadd.f32 %v81, %v83
    %v86 = vmul.f32 %v84, 0.5
    %v87 = vmul.f32 %v85, 0.5
    %v88 = vld [vmem:[#allocation8] sm:$0xff]
    %v89 = vld [vmem:[#allocation8 + $0x8] sm:$0xff]
    %v90 = vld [vmem:[#allocation8 + $0x10] sm:$0xff]
    %v91 = vld [vmem:[#allocation8 + $0x18] sm:$0xff]
    %v92 = vld [vmem:[#allocation8 + $0x20] sm:$0xff]
    %v93 = vld [vmem:[#allocation8 + $0x28] sm:$0xff]
    %v94 = vld [vmem:[#allocation8 + $0x30] sm:$0xff]
    %v95 = vld [vmem:[#allocation8 + $0x38] sm:$0xff]
    %v96 = vld [vmem:[#allocation8 + $0x40] sm:$0xff]
    %v97 = vld [vmem:[#allocation8 + $0x48] sm:$0xff]
    %v98 = vld [vmem:[#allocation8 + $0x50] sm:$0xff]
    %v99 = vld [vmem:[#allocation8 + $0x58] sm:$0xff]
    %v100 = vld [vmem:[#allocation8 + $0x60] sm:$0xff]
    %v101 = vld [vmem:[#allocation8 + $0x68] sm:$0xff]
    %v102 = vld [vmem:[#allocation8 + $0x70] sm:$0xff]
    %v103 = vld [vmem:[#allocation8 + $0x78] sm:$0xff]
    %v104 = vld [vmem:[#allocation8 + $0x80] sm:$0xff]
    %v105 = vld [vmem:[#allocation8 + $0x88] sm:$0xff]
    %v106 = vld [vmem:[#allocation8 + $0x90] sm:$0xff]
    %v107 = vld [vmem:[#allocation8 + $0x98] sm:$0xff]
    %v108 = vld [vmem:[#allocation8 + $0xa0] sm:$0xff]
    %v109 = vld [vmem:[#allocation8 + $0xa8] sm:$0xff]
    %v110 = vld [vmem:[#allocation8 + $0xb0] sm:$0xff]
    %v111 = vld [vmem:[#allocation8 + $0xb8] sm:$0xff]
    %v112 = vld [vmem:[#allocation8 + $0xc0] sm:$0xff]
    %v113 = vld [vmem:[#allocation8 + $0xc8] sm:$0xff]
    %v114 = vld [vmem:[#allocation8 + $0xd0] sm:$0xff]
    %v115 = vld [vmem:[#allocation8 + $0xd8] sm:$0xff]
    %v116 = vld [vmem:[#allocation8 + $0xe0] sm:$0xff]
    %v117 = vld [vmem:[#allocation8 + $0xe8] sm:$0xff]
    %v118 = vld [vmem:[#allocation8 + $0xf0] sm:$0xff]
    %v119 = vld [vmem:[#allocation8 + $0xf8] sm:$0xff]
    %v120 = vld [vmem:[%s4] sm:$0x1]
    %v122 = vperm.slane %v120, 0
    %124 = vmatpush.msra.mxu0 %v103
    %125 = vmatpush.msra.mxu0 %v102
    %126 = vmatpush.msra.mxu0 %v101
    %127 = vmatpush.msra.mxu0 %v100
    %128 = vmatpush.msra.mxu0 %v99
    %129 = vmatpush.msra.mxu0 %v98
    %130 = vmatpush.msra.mxu0 %v97
    %131 = vmatpush.msra.mxu0 %v96
    %132 = vmatpush.msra.mxu0 %v95
    %133 = vmatpush.msra.mxu0 %v94
    %134 = vmatpush.msra.mxu0 %v93
    %135 = vmatpush.msra.mxu0 %v92
    %136 = vmatpush.msra.mxu0 %v91
    %137 = vmatpush.msra.mxu0 %v90
    %138 = vmatpush.msra.mxu0 %v89
    %139 = vmatpush.msra.mxu0 %v88
    %140 = vmatmul.f32.gmra.mxu0 %v86
    %v141 = vpop.f32.mrf.mxu0
    %v142 = vadd.f32 %v122, %v141
    %143 = vdwg.mxu0
    %144 = vmatpush.msra.mxu0 %v119
    %145 = vmatpush.msra.mxu0 %v118
    %146 = vmatpush.msra.mxu0 %v117
    %147 = vmatpush.msra.mxu0 %v116
    %148 = vmatpush.msra.mxu0 %v115
    %149 = vmatpush.msra.mxu0 %v114
    %150 = vmatpush.msra.mxu0 %v113
    %151 = vmatpush.msra.mxu0 %v112
    %152 = vmatpush.msra.mxu0 %v111
    %153 = vmatpush.msra.mxu0 %v110
    %154 = vmatpush.msra.mxu0 %v109
    %155 = vmatpush.msra.mxu0 %v108
    %156 = vmatpush.msra.mxu0 %v107
    %157 = vmatpush.msra.mxu0 %v106
    %158 = vmatpush.msra.mxu0 %v105
    %159 = vmatpush.msra.mxu0 %v104
    %160 = vmatmul.f32.gmra.mxu0 %v87
    %v161 = vpop.f32.mrf.mxu0
    %v162 = vadd.f32 %v142, %v161
    %163 = vdwg.mxu0
    %v164 = vld [vmem:[#allocation2] sm:$0xff]
    %v165 = vld [vmem:[#allocation2 + $0x8] sm:$0xff]
    %v166 = vld [vmem:[#allocation2 + $0x10] sm:$0xff]
    %v167 = vld [vmem:[#allocation2 + $0x18] sm:$0xff]
    %v168 = vld [vmem:[#allocation2 + $0x20] sm:$0xff]
    %v169 = vld [vmem:[#allocation2 + $0x28] sm:$0xff]
    %v170 = vld [vmem:[#allocation2 + $0x30] sm:$0xff]
    %v171 = vld [vmem:[#allocation2 + $0x38] sm:$0xff]
    %v173 = vrot.slane %v162, 1
    %v174 = vrot.slane %v162, 2
    %v175 = vrot.slane %v162, 3
    %v176 = vrot.slane %v162, 4
    %v177 = vrot.slane %v162, 5
    %v178 = vrot.slane %v162, 6
    %v179 = vrot.slane %v162, 7
    %v180 = vperm.slane %v162, 0
    %v181 = vperm.slane %v173, 0
    %v182 = vperm.slane %v174, 0
    %v183 = vperm.slane %v175, 0
    %v184 = vperm.slane %v176, 0
    %v185 = vperm.slane %v177, 0
    %v186 = vperm.slane %v178, 0
    %v187 = vperm.slane %v179, 0
    %v196 = vmul.f32 %v164, %v180
    %v197 = vmul.f32 %v165, %v181
    %v198 = vmul.f32 %v166, %v182
    %v199 = vmul.f32 %v167, %v183
    %v200 = vmul.f32 %v168, %v184
    %v201 = vmul.f32 %v169, %v185
    %v202 = vmul.f32 %v170, %v186
    %v203 = vmul.f32 %v171, %v187
    %204 = vst [vmem:[#allocation10] sm:$0xff] %v196
    %205 = vst [vmem:[#allocation10 + $0x8] sm:$0xff] %v197
    %206 = vst [vmem:[#allocation10 + $0x10] sm:$0xff] %v198
    %207 = vst [vmem:[#allocation10 + $0x18] sm:$0xff] %v199
    %208 = vst [vmem:[#allocation10 + $0x20] sm:$0xff] %v200
    %209 = vst [vmem:[#allocation10 + $0x28] sm:$0xff] %v201
    %210 = vst [vmem:[#allocation10 + $0x30] sm:$0xff] %v202
    %211 = vst [vmem:[#allocation10 + $0x38] sm:$0xff] %v203
    // Predicated region
    $region38: #{tpu_custom_call.1} parent=1 // pred_check
      _
    $region39: #{tpu_custom_call.1} parent=1 // pred_check_branch
      %213 = sbr.rel (0) target = $region41
    $region40: #{tpu_custom_call.1} parent=1 // pred_region
      %215 = vsyncadd [#allocation4], 0
      %s216 = sshll.u32 [#allocation10], 4
      %s217 = int_to_ptr.vmem [resolvable:$true] %s216
      %s218 = sshll.u32 %s5, 4
      %s219 = int_to_ptr.hbm [resolvable:$true] %s218
      %224 = dma.vmem_to_hbm [thread:$0]  %s217, 1024, %s219, [#allocation4], 128, 128, 8
    $region41: #{tpu_custom_call.1} parent=1 // pred_fallthru
      _
    // Predicated region
    $region42: #{tpu_custom_call.1} parent=1 // pred_check
      _
    $region43: #{tpu_custom_call.1} parent=1 // pred_check_branch
      %226 = sbr.rel (0) target = $region45
    $region44: #{tpu_custom_call.1} parent=1 // pred_region
      %228 = dma.done [#allocation4], 1024
    $region45: #{tpu_custom_call.1} parent=1 // pred_fallthru
      _
    %229 = vsyncpa [#allocation3], 1
    %230 = vsyncpa [#allocation6], 1
    %231 = vsyncpa [#allocation9], 1
    %232 = vsyncpa [#allocation4], 1

</llo_original>
